<compile_context>
chip_gen: v6e
topology: v6e:2x2x1
jax: 0.10.0
libtpu: 0.0.40
codegen_flags: <defaults>
</compile_context>

<pallas_src>
import jax
import jax.numpy as jnp
from jax.experimental import pallas as pl
from jax.experimental.pallas import tpu as pltpu

MARGIN = 2.0
PAIRWISE_EPS = 1e-6                       # torch F.pairwise_distance default eps

_WORKING_SET_BUDGET = 24 * 1024 * 1024    # inputs (2x double-buffered) + f32 temps
_PER_BUFFER_BUDGET = 2 * 1024 * 1024      # ~1-4 MiB/block saturates HBM roofline
_MAX_TILE_ROWS = 2048
_VMEM_LIMIT_BYTES = 48 * 1024 * 1024      # < v7x's 64 MiB physical VMEM


def _round_up(x, m):
    return ((x + m - 1) // m) * m


def _cdiv(a, b):
    return -(-a // b)


def _pick_tile(b, d, itemsize):
    """Pick a row-tile size that fits VMEM and (nearly) divides B."""
    d_lanes = _round_up(d, 128)                       # VMEM lane padding of D
    # Per-row live bytes: 2 inputs x 2 pipeline buffers in native dtype plus
    # ~3 f32 temporaries (x1/x2 upcasts + diff) the compiler keeps around.
    bytes_per_row = d_lanes * (4 * itemsize + 3 * 4)
    if 8 * bytes_per_row > _VMEM_LIMIT_BYTES:
        raise ValueError(
            f"Feature dim D={d} is too large for a single (8, D) tile under the "
            f"{_VMEM_LIMIT_BYTES} byte VMEM limit; a D-reduction axis is needed.")
    tb_ws = max(8, _WORKING_SET_BUDGET // bytes_per_row)
    tb_buf = max(8, _PER_BUFFER_BUDGET // (d_lanes * itemsize))
    tb_cap = max(8, (min(tb_ws, tb_buf, _MAX_TILE_ROWS) // 8) * 8)
    # Balance the tiles so they (nearly) divide B -> at most one ragged tile,
    # no wrapper-side padding of the big inputs.
    n_steps = _cdiv(b, tb_cap)
    tb = min(tb_cap, _round_up(_cdiv(b, n_steps), 8))
    n_steps = _cdiv(b, tb)
    return tb, n_steps


def _make_kernel(b_true, tb, margin):
    def kernel(x1_ref, x2_ref, lab_ref, out_ref):
        i = pl.program_id(0)

        @pl.when(i == 0)
        def _init():
            out_ref[...] = jnp.zeros_like(out_ref)

        x1 = x1_ref[...].astype(jnp.float32)           # (tb, D), native dtype DMA
        x2 = x2_ref[...].astype(jnp.float32)           # (tb, D)
        lab = lab_ref[...].astype(jnp.float32)         # (tb, 1)

        diff = x1 - x2 + PAIRWISE_EPS                  # VPU
        d2 = jnp.sum(diff * diff, axis=-1, keepdims=True)   # (tb, 1) lane reduce
        dist = jnp.sqrt(d2)                                  # EUP
        hinge = jnp.maximum(margin - dist, 0.0)
        per_row = (1.0 - lab) * d2 + lab * (hinge * hinge)   # reuse d2, no d*d

        # Mask rows of the (partial) boundary tile.  Keep this a select so that
        # garbage values from the out-of-bounds part of the block DMA (and the
        # matching garbage labels) can never reach the accumulator.
        row_ids = jax.lax.broadcasted_iota(jnp.int32, (tb, 1), 0) + i * tb
        per_row = jnp.where(row_ids < b_true, per_row, 0.0)

        # Output block is resident across the whole grid -> accumulate in place.
        out_ref[...] += jnp.sum(per_row, keepdims=True)

    return kernel


def contrastive_loss(output1, output2, label, *, margin=MARGIN):
    """output1/output2: (B, D) float (f32 or bf16); label: (B,). Returns scalar f32."""
    b, d = output1.shape
    itemsize = jnp.dtype(output1.dtype).itemsize

    tb, n_steps = _pick_tile(b, d, itemsize)
    label2d = label.reshape(b, 1)                     # tiny; no padding needed

    kernel = _make_kernel(b, tb, float(margin))

    cost = pl.CostEstimate(
        flops=int(4 * b * d + 8 * b),
        transcendentals=int(b),
        bytes_accessed=int(2 * b * d * itemsize
                           + b * jnp.dtype(label2d.dtype).itemsize + 4),
    )

    total = pl.pallas_call(
        kernel,
        out_shape=jax.ShapeDtypeStruct((1, 1), jnp.float32),
        grid_spec=pltpu.PrefetchScalarGridSpec(
            num_scalar_prefetch=0,
            grid=(n_steps,),
            in_specs=[
                pl.BlockSpec((tb, d), lambda i: (i, 0)),
                pl.BlockSpec((tb, d), lambda i: (i, 0)),
                pl.BlockSpec((tb, 1), lambda i: (i, 0)),
            ],
            out_specs=pl.BlockSpec((1, 1), lambda i: (0, 0)),
        ),
        compiler_params=pltpu.CompilerParams(
            dimension_semantics=("arbitrary",),
            vmem_limit_bytes=_VMEM_LIMIT_BYTES,
        ),
        cost_estimate=cost,
    )(output1, output2, label2d)

    return total[0, 0] / b


def _reference_loss(output1, output2, label, margin=MARGIN):
    # Pure-JAX reference mirroring the PyTorch forward.
    o1 = output1.astype(jnp.float32)
    o2 = output2.astype(jnp.float32)
    diff = o1 - o2 + PAIRWISE_EPS
    dist = jnp.sqrt(jnp.sum(diff * diff, axis=-1))
    lab = label.astype(jnp.float32)
    return jnp.mean((1.0 - lab) * dist**2
                    + lab * jnp.clip(margin - dist, 0.0, None) ** 2)


if __name__ == "__main__":
    key = jax.random.PRNGKey(0)

    # Case 1: aligned shapes (B multiple of 8), jitted wrapper.
    k1, k2, k3 = jax.random.split(key, 3)
    B, D = 8, 32
    o1 = jax.random.normal(k1, (B, D), dtype=jnp.float32)
    o2 = jax.random.normal(k2, (B, D), dtype=jnp.float32)
    lab = jax.random.bernoulli(k3, p=0.5, shape=(B,)).astype(jnp.float32)

    loss = jax.jit(contrastive_loss)(o1, o2, lab)
    jax.block_until_ready(loss)
    ref = _reference_loss(o1, o2, lab)
    assert jnp.allclose(loss, ref, rtol=1e-5, atol=1e-5), (loss, ref)

    # Case 2: B not a multiple of the tile -> exercises the boundary block
    # (no wrapper padding) + in-kernel row mask.
    k4, k5, k6 = jax.random.split(jax.random.PRNGKey(1), 3)
    B2, D2 = 10, 48
    o1b = jax.random.normal(k4, (B2, D2), dtype=jnp.float32)
    o2b = jax.random.normal(k5, (B2, D2), dtype=jnp.float32)
    labb = jax.random.bernoulli(k6, p=0.5, shape=(B2,)).astype(jnp.float32)

    loss2 = contrastive_loss(o1b, o2b, labb)
    jax.block_until_ready(loss2)
    ref2 = _reference_loss(o1b, o2b, labb)
    assert jnp.allclose(loss2, ref2, rtol=1e-5, atol=1e-5), (loss2, ref2)

    # Case 3: bf16 inputs -> native-dtype DMA, f32 math inside the kernel.
    k7, k8, k9 = jax.random.split(jax.random.PRNGKey(2), 3)
    B3, D3 = 24, 128
    o1c = jax.random.normal(k7, (B3, D3), dtype=jnp.bfloat16)
    o2c = jax.random.normal(k8, (B3, D3), dtype=jnp.bfloat16)
    labc = jax.random.bernoulli(k9, p=0.5, shape=(B3,)).astype(jnp.float32)

    loss3 = contrastive_loss(o1c, o2c, labc)
    jax.block_until_ready(loss3)
    ref3 = _reference_loss(o1c, o2c, labc)
    assert jnp.allclose(loss3, ref3, rtol=1e-4, atol=1e-4), (loss3, ref3)

    print("KERNEL_OK")
</pallas_src>

<mosaic_0001>
module attributes {stable_mosaic.version = 11 : i64} {
  func.func @kernel(%arg0: i32, %arg1: memref<8x32xf32, #tpu.memory_space<vmem>>, %arg2: memref<8x32xf32, #tpu.memory_space<vmem>>, %arg3: memref<8x1xf32, #tpu.memory_space<vmem>>, %arg4: memref<1x1xf32, #tpu.memory_space<vmem>>) attributes {dimension_semantics = [#tpu.dimension_semantics<arbitrary>], iteration_bounds = array<i64: 1>, scalar_prefetch = 0 : i64, scratch_operands = 0 : i64, tpu.core_type = #tpu.core_type<tc>, window_params = [{transform_indices = @transform_0, window_bounds = array<i64: 8, 32>}, {transform_indices = @transform_1, window_bounds = array<i64: 8, 32>}, {transform_indices = @transform_2, window_bounds = array<i64: 8, 1>}, {pipeline_mode = #tpu.pipeline_mode<synchronous>, transform_indices = @transform_3, window_bounds = array<i64: 1, 1>}]} {
    %c0_i32 = arith.constant 0 : i32
    %0 = arith.cmpi eq, %arg0, %c0_i32 : i32
    %1 = arith.extui %0 : i1 to i32
    %c0_i32_0 = arith.constant 0 : i32
    %2 = arith.cmpi ne, %1, %c0_i32_0 : i32
    scf.if %2 {
      %cst_17 = arith.constant 0.000000e+00 : f32
      %39 = vector.broadcast %cst_17 : f32 to vector<1x1xf32>
      %c0_18 = arith.constant 0 : index
      %c0_19 = arith.constant 0 : index
      %40 = vector.load %arg4[%c0_18, %c0_19] : memref<1x1xf32, #tpu.memory_space<vmem>>, vector<1x1xf32>
      tpu.vector_store %arg4[%c0_18, %c0_19], %39 {strides = array<i32>} : memref<1x1xf32, #tpu.memory_space<vmem>>, vector<1x1xf32>,
    } else {
    }
    %c0 = arith.constant 0 : index
    %c0_1 = arith.constant 0 : index
    %3 = vector.load %arg1[%c0, %c0_1] : memref<8x32xf32, #tpu.memory_space<vmem>>, vector<8x32xf32>
    %c0_2 = arith.constant 0 : index
    %c0_3 = arith.constant 0 : index
    %4 = vector.load %arg2[%c0_2, %c0_3] : memref<8x32xf32, #tpu.memory_space<vmem>>, vector<8x32xf32>
    %c0_4 = arith.constant 0 : index
    %c0_5 = arith.constant 0 : index
    %5 = vector.load %arg3[%c0_4, %c0_5] : memref<8x1xf32, #tpu.memory_space<vmem>>, vector<8x1xf32>
    %6 = arith.subf %3, %4 : vector<8x32xf32>
    %cst = arith.constant 9.99999997E-7 : f32
    %7 = vector.broadcast %cst : f32 to vector<8x32xf32>
    %8 = arith.addf %6, %7 : vector<8x32xf32>
    %9 = arith.mulf %8, %8 : vector<8x32xf32>
    %cst_6 = arith.constant dense<0.000000e+00> : vector<8xf32>
    %10 = vector.multi_reduction <add>, %9, %cst_6 [1] : vector<8x32xf32> to vector<8xf32>
    %11 = vector.shape_cast %10 : vector<8xf32> to vector<8x1xf32>
    %12 = math.sqrt %11 : vector<8x1xf32>
    %cst_7 = arith.constant 2.000000e+00 : f32
    %13 = vector.broadcast %cst_7 : f32 to vector<8x1xf32>
    %14 = arith.subf %13, %12 : vector<8x1xf32>
    %cst_8 = arith.constant 0.000000e+00 : f32
    %15 = vector.broadcast %cst_8 : f32 to vector<8x1xf32>
    %16 = arith.maximumf %14, %15 : vector<8x1xf32>
    %cst_9 = arith.constant 1.000000e+00 : f32
    %17 = vector.broadcast %cst_9 : f32 to vector<8x1xf32>
    %18 = arith.subf %17, %5 : vector<8x1xf32>
    %19 = arith.mulf %18, %11 : vector<8x1xf32>
    %20 = arith.mulf %16, %16 : vector<8x1xf32>
    %21 = arith.mulf %5, %20 : vector<8x1xf32>
    %22 = arith.addf %19, %21 : vector<8x1xf32>
    %23 = tpu.iota {dimensions = array<i32: 0>} : vector<8x1xi32>
    %c8_i32 = arith.constant 8 : i32
    %24 = arith.muli %arg0, %c8_i32 : i32
    %25 = vector.broadcast %24 : i32 to vector<8x1xi32>
    %26 = arith.addi %23, %25 : vector<8x1xi32>
    %c8_i32_10 = arith.constant 8 : i32
    %27 = vector.broadcast %c8_i32_10 : i32 to vector<8x1xi32>
    %28 = arith.cmpi slt, %26, %27 : vector<8x1xi32>
    %cst_11 = arith.constant 0.000000e+00 : f32
    %29 = vector.broadcast %cst_11 : f32 to vector<8x1xf32>
    %30 = arith.select %28, %22, %29 : vector<8x1xi1>, vector<8x1xf32>
    %c0_12 = arith.constant 0 : index
    %c0_13 = arith.constant 0 : index
    %31 = vector.load %arg4[%c0_12, %c0_13] : memref<1x1xf32, #tpu.memory_space<vmem>>, vector<1x1xf32>
    %32 = vector.shape_cast %30 : vector<8x1xf32> to vector<1x8x1xf32>
    %cst_14 = arith.constant dense<0.000000e+00> : vector<1xf32>
    %33 = vector.multi_reduction <add>, %32, %cst_14 [1, 2] : vector<1x8x1xf32> to vector<1xf32>
    %34 = vector.shape_cast %33 : vector<1xf32> to vector<1x1x1xf32>
    %35 = vector.extract %34[0, 0, 0] : f32 from vector<1x1x1xf32>
    %36 = vector.broadcast %35 : f32 to vector<1x1xf32>
    %37 = arith.addf %31, %36 : vector<1x1xf32>
    %c0_15 = arith.constant 0 : index
    %c0_16 = arith.constant 0 : index
    %38 = vector.load %arg4[%c0_15, %c0_16] : memref<1x1xf32, #tpu.memory_space<vmem>>, vector<1x1xf32>
    tpu.vector_store %arg4[%c0_15, %c0_16], %37 {strides = array<i32>} : memref<1x1xf32, #tpu.memory_space<vmem>>, vector<1x1xf32>,
    return
  }
  func.func @transform_0(%arg0: i32) -> (i32, i32) {
    %c0_i32 = arith.constant 0 : i32
    %c0_i32_0 = arith.constant 0 : i32
    return %arg0, %c0_i32 : i32, i32
  }
  func.func @transform_1(%arg0: i32) -> (i32, i32) {
    %c0_i32 = arith.constant 0 : i32
    %c0_i32_0 = arith.constant 0 : i32
    return %arg0, %c0_i32 : i32, i32
  }
  func.func @transform_2(%arg0: i32) -> (i32, i32) {
    %c0_i32 = arith.constant 0 : i32
    %c0_i32_0 = arith.constant 0 : i32
    return %arg0, %c0_i32 : i32, i32
  }
  func.func @transform_3(%arg0: i32) -> (i32, i32) {
    %c0_i32 = arith.constant 0 : i32
    %c0_i32_0 = arith.constant 0 : i32
    %c0_i32_1 = arith.constant 0 : i32
    return %c0_i32, %c0_i32_0 : i32, i32
  }
}

</mosaic_0001>

<llo_original>
// kernel: contrastive_loss.1
$region0: #{contrastive_loss.1}
  #allocation0 [shape = 'u32[]', space=smem, size = 0x4, offset = 0x4, fixed_abs, tag = 'smem constant byte address 0x4 - core index']
  #allocation1 [shape = 'u32[144,128]{1,0:T(1,128)}', space=vmem, size = 0x12000, scoped, tag = 'internal scratch']
  %s0 = inlined_call_operand.vmem [shape: f32[8,32], index: 0, kind: input, shape index: {}]
  %s1 = inlined_call_operand.hbm [shape: f32[8,32], index: 1, kind: input, shape index: {}]
  %s2 = inlined_call_operand.vmem [shape: f32[8,1], index: 2, kind: input, shape index: {}]
  %s3 = inlined_call_operand.hbm [shape: f32[1,1], index: 3, kind: output, shape index: {}]
  %s4 = sld [smem:[#allocation0]]
  $region30: #{contrastive_loss.1} parent=0
    _
  %s6 = ssub.s32 1, %s4
  %s7 = scalar_select 0, %s6, %s4
  $region1: #{contrastive_loss.1} parent=0
    #allocation2 [shape = 'u8[4096]{0}', space=vmem, size = 0x1000, scoped, tag = 'input window, operand 1, single buffered']
    #allocation3 [shape = 's32[1]{0}', space=sflag, size = 0x4, scoped, tag = 'scoped memory for contrastive_loss.1']
    #allocation4 [shape = 's32[1]{0}', space=sflag, size = 0x4, scoped, tag = 'scoped memory for contrastive_loss.1']
    #allocation5 [shape = 'u8[512]{0}', space=vmem, size = 0x400, scoped, tag = 'output window, operand 0, single buffered']
    %8 = vsyncpa [#allocation3], 0
    %9 = vsyncpa [#allocation4], 0
    // Predicated region
    $region2: #{contrastive_loss.1} parent=1 // pred_check
      _
    $region3: #{contrastive_loss.1} parent=1 // pred_check_branch
      %11 = sbr.rel (0) target = $region5
    $region4: #{contrastive_loss.1} parent=1 // pred_region
      _
    $region5: #{contrastive_loss.1} parent=1 // pred_fallthru
      _
    // Predicated region
    $region6: #{contrastive_loss.1} parent=1 // pred_check
      _
    $region7: #{contrastive_loss.1} parent=1 // pred_check_branch
      %13 = sbr.rel (0) target = $region9
    $region8: #{contrastive_loss.1} parent=1 // pred_region
      %s15 = ssub.s32 128, 128
      %16 = vsyncadd [#allocation3], %s15
      %s18 = sshll.u32 [#allocation2], 4
      %s19 = int_to_ptr.vmem [resolvable:$true] %s18
      %21 = dma.hbm_to_vmem [thread:$0]  %s1, 128, %s19, [#allocation3]
    $region9: #{contrastive_loss.1} parent=1 // pred_fallthru
      _
    // Predicated region
    $region10: #{contrastive_loss.1} parent=1 // pred_check
      _
    $region11: #{contrastive_loss.1} parent=1 // pred_check_branch
      %23 = sbr.rel (0) target = $region13
    $region12: #{contrastive_loss.1} parent=1 // pred_region
      _
    $region13: #{contrastive_loss.1} parent=1 // pred_fallthru
      _
    // Predicated region
    $region14: #{contrastive_loss.1} parent=1 // pred_check
      _
    $region15: #{contrastive_loss.1} parent=1 // pred_check_branch
      %25 = sbr.rel (0) target = $region17
    $region16: #{contrastive_loss.1} parent=1 // pred_region
      %26 = dma.done [#allocation3], 128
    $region17: #{contrastive_loss.1} parent=1 // pred_fallthru
      _
    %p27 = scmp.eq.s32.totalorder 0, 0
    // Predicated region
    $region18: #{contrastive_loss.1} parent=1 // pred_check
      %p28 = pneg %p27
    $region19: #{contrastive_loss.1} parent=1 // pred_check_branch
      %30 = sbr.rel (%p28) target = $region21
    $region20: #{contrastive_loss.1} parent=1 // pred_region
      %vm31 = vcmask 0
      %32 = vst.msk [vmem:[#allocation5] sm:$0x1] %vm31, 0.0
    $region21: #{contrastive_loss.1} parent=1 // pred_fallthru
      _
    %v33 = vld [vmem:[%s0] sm:$0xff]
    %v34 = vld [vmem:[#allocation2] sm:$0xff]
    %v35 = vld [vmem:[%s2] sm:$0xff]
    %v36 = vsub.f32 %v33, %v34
    %v37 = vadd.f32 %v36, 1e-06
    %v38 = vmul.f32 %v37, %v37
    %vm39 = vcmask 261120
    %v40 = vsel %vm39, %v38, 0.0
    %41 = vadd.xlane.f32.xlu0 %v40
    %v42 = vpop.xlane.xlu0 %41
    %v43 = vrsqrt.pop %v42
    %v44 = vmul.f32 %v42, %v43
    %vm45 = vcmp.eq.f32.partialorder %v42, inf
    %v46 = vsel %vm45, %v42, %v44
    %vm47 = vcmp.eq.f32.partialorder %v42, 0.0
    %v48 = vand.u32 %v42, 2147483648
    %v49 = vsel %vm47, %v48, %v46
    %v50 = vsub.f32 2.0, %v49
    %v51 = vmax.f32 %v50, 0.0
    %v52 = vsub.f32 1.0, %v35
    %v53 = vmul.f32 %v52, %v42
    %v54 = vmul.f32 %v51, %v51
    %v55 = vmul.f32 %v35, %v54
    %v56 = vadd.f32 %v53, %v55
    %v57 = vlaneseq
    %v58 = vshrl.u32 %v57, 7
    %s59 = smul.u32 0, 8
    %v60 = vstv %s59
    %v61 = vadd.s32 %v58, %v60
    %vm62 = vcmp.lt.s32.totalorder %v61, 8
    %v63 = vsel %vm62, %v56, 0.0
    %v64 = vld [vmem:[#allocation5] sm:$0x1]
    %vm65 = vcmask 7168
    %v66 = vsel %vm65, %v63, 0.0
    %67 = vadd.xlane.f32.xlu0 %v66
    %v68 = vpop.xlane.xlu0 %67
    %v69 = vrot.slane %v68, 4
    %v70 = vadd.f32 %v68, %v69
    %v71 = vrot.slane %v70, 2
    %v72 = vadd.f32 %v70, %v71
    %v73 = vrot.slane %v72, 1
    %v74 = vadd.f32 %v72, %v73
    %s75 = vtos %v74
    %v76 = vstv %s75
    %v77 = vadd.f32 %v64, %v76
    %vm78 = vcmask 0
    %79 = vst.msk [vmem:[#allocation5] sm:$0x1] %vm78, %v77
    // Predicated region
    $region22: #{contrastive_loss.1} parent=1 // pred_check
      _
    $region23: #{contrastive_loss.1} parent=1 // pred_check_branch
      %81 = sbr.rel (0) target = $region25
    $region24: #{contrastive_loss.1} parent=1 // pred_region
      %s83 = ssub.s32 16, 16
      %84 = vsyncadd [#allocation4], %s83
      %s86 = sshll.u32 [#allocation5], 4
      %s87 = int_to_ptr.vmem [resolvable:$true] %s86
      %89 = dma.vmem_to_hbm [thread:$0]  %s87, 16, %s3, [#allocation4]
    $region25: #{contrastive_loss.1} parent=1 // pred_fallthru
      _
    // Predicated region
    $region26: #{contrastive_loss.1} parent=1 // pred_check
      _
    $region27: #{contrastive_loss.1} parent=1 // pred_check_branch
      %91 = sbr.rel (0) target = $region29
    $region28: #{contrastive_loss.1} parent=1 // pred_region
      %92 = dma.done [#allocation4], 16
    $region29: #{contrastive_loss.1} parent=1 // pred_fallthru
      _
    %93 = vsyncpa [#allocation3], 1
    %94 = vsyncpa [#allocation4], 1

</llo_original>
